<compile_context>
chip_gen: v6e
topology: v6e:2x2x1
jax: 0.10.0
libtpu: 0.0.40
codegen_flags: <defaults>
</compile_context>

<pallas_src>
import functools
import math

import jax
import jax.numpy as jnp
from jax.experimental import pallas as pl
from jax.experimental.pallas import tpu as pltpu


def _round_up(x: int, m: int) -> int:
    return ((x + m - 1) // m) * m


# ----------------------------------------------------------------------------
# Parameter initialization (plain JAX) — mirrors sin_cos_position_initial
# ----------------------------------------------------------------------------
def sin_cos_position_initial(max_position: int, hidden_dim: int) -> jnp.ndarray:
    position = jnp.arange(max_position, dtype=jnp.float32)[:, None]              # (P, 1)
    div_term = jnp.exp(
        jnp.arange(0, hidden_dim, 2, dtype=jnp.float32)
        * (-math.log(10000.0) / hidden_dim)
    )                                                                            # (ceil(H/2),)
    gain = 2.0 / (hidden_dim + 4.0 * hidden_dim)
    pe = jnp.zeros((max_position, hidden_dim), dtype=jnp.float32)
    pe = pe.at[:, 0::2].set(jnp.sin(position * div_term) * gain)
    # guard odd hidden_dim: cos block has floor(H/2) columns
    pe = pe.at[:, 1::2].set((jnp.cos(position * div_term) * gain)[:, : hidden_dim // 2])
    return pe


# ----------------------------------------------------------------------------
# Kernel: one (TILE_R, H) output tile per grid step.
#   ids_ref   : (TILE_R, 1)  int32  VMEM  — block of flattened position ids
#   table_ref : (P, Hpad)    f32    VMEM  — full table, resident across the grid
#   out_ref   : (TILE_R, Hpad)             — gathered rows
# Gather = one_hot(ids) @ table on the MXU (exact row copies at HIGHEST precision).
# ----------------------------------------------------------------------------
def _position_embedding_kernel(ids_ref, table_ref, out_ref, *, max_position: int):
    ids = jnp.clip(ids_ref[...], 0, max_position - 1)            # (TILE_R, 1)
    tile_r = out_ref.shape[0]
    p = table_ref.shape[0]
    col = jax.lax.broadcasted_iota(jnp.int32, (tile_r, p), 1)     # (TILE_R, P)
    one_hot = (ids == col).astype(table_ref.dtype)                # (TILE_R, P)
    rows = jnp.dot(
        one_hot,
        table_ref[...],
        precision=jax.lax.Precision.HIGHEST,
        preferred_element_type=jnp.float32,
    )                                                             # (TILE_R, Hpad)
    out_ref[...] = rows.astype(out_ref.dtype)


# ----------------------------------------------------------------------------
# Wrapper
# ----------------------------------------------------------------------------
def position_embedding_forward(position_ids: jnp.ndarray,
                               table: jnp.ndarray,
                               max_position: int,
                               *,
                               tile_rows: int = 256,
                               out_dtype=None) -> jnp.ndarray:
    """position_ids: int array of any shape -> output of shape position_ids.shape + (H,)."""
    orig_shape = position_ids.shape
    ids_flat = position_ids.reshape(-1).astype(jnp.int32)
    n = ids_flat.shape[0]
    p, h = table.shape
    out_dtype = table.dtype if out_dtype is None else jnp.dtype(out_dtype)

    # Lane-dense output path: pad hidden dim to a multiple of 128 (no-op when already aligned).
    h_pad = _round_up(h, 128)
    if h_pad != h:
        table = jnp.pad(table, ((0, 0), (0, h_pad - h)))

    # Multi-row tiles: multiple of 8 sublanes; shrink for tiny inputs.
    tile_r = max(8, min(_round_up(tile_rows, 8), _round_up(n, 8)))
    n_pad = _round_up(n, tile_r)
    if n_pad != n:
        ids_flat = jnp.pad(ids_flat, (0, n_pad - n))              # pad with id 0 (valid row)
    ids_2d = ids_flat.reshape(n_pad, 1)

    grid = (n_pad // tile_r,)

    # VMEM budget: resident table (+ double buffering headroom) + in/out tiles.
    itemsize = jnp.dtype(table.dtype).itemsize
    table_bytes = p * h_pad * itemsize
    tile_bytes = tile_r * (h_pad * jnp.dtype(out_dtype).itemsize + 4)
    vmem_limit = min(max(2 * table_bytes + 4 * tile_bytes + (2 << 20), 32 << 20), 128 << 20)

    kernel = functools.partial(_position_embedding_kernel, max_position=max_position)

    out_flat = pl.pallas_call(
        kernel,
        grid_spec=pltpu.PrefetchScalarGridSpec(
            num_scalar_prefetch=0,
            grid=grid,
            in_specs=[
                pl.BlockSpec((tile_r, 1), lambda i: (i, 0)),      # ids tile
                pl.BlockSpec((p, h_pad), lambda i: (0, 0)),       # full table, VMEM-resident
            ],
            out_specs=pl.BlockSpec((tile_r, h_pad), lambda i: (i, 0)),
        ),
        out_shape=jax.ShapeDtypeStruct((n_pad, h_pad), out_dtype),
        compiler_params=pltpu.CompilerParams(
            dimension_semantics=("parallel",),
            vmem_limit_bytes=vmem_limit,
        ),
    )(ids_2d, table)

    out = out_flat[:n, :h]
    return out.reshape(orig_shape + (h,))


# ----------------------------------------------------------------------------
# Demo / correctness check
# ----------------------------------------------------------------------------
if __name__ == "__main__":
    MAX_POSITION = 64      # scaled-down max_position (module default 15000)
    HIDDEN_DIM = 128       # scaled-down hidden_dim  (module default 300)
    BATCH, SEQ = 2, 8

    table = sin_cos_position_initial(MAX_POSITION, HIDDEN_DIM)

    key = jax.random.PRNGKey(0)
    # deliberately sample some ids >= MAX_POSITION to exercise clamp_max
    position_ids = jax.random.randint(
        key, (BATCH, SEQ), minval=0, maxval=MAX_POSITION + 16, dtype=jnp.int32)

    out = position_embedding_forward(position_ids, table, MAX_POSITION)
    out = jax.block_until_ready(out)

    # plain-JAX reference gather (ids here are non-negative, so this matches clamp_max)
    ref = jnp.take(table, jnp.clip(position_ids, 0, MAX_POSITION - 1), axis=0)

    assert out.shape == (BATCH, SEQ, HIDDEN_DIM)
    assert out.dtype == jnp.float32
    assert jnp.allclose(out, ref, atol=2e-5, rtol=1e-3), "mismatch vs reference gather"

    print("KERNEL_OK")
</pallas_src>

<mosaic_0001>
module attributes {stable_mosaic.version = 11 : i64} {
  func.func @_position_embedding_kernel(%arg0: i32, %arg1: memref<16x1xi32, #tpu.memory_space<vmem>>, %arg2: memref<64x128xf32, #tpu.memory_space<vmem>>, %arg3: memref<16x128xf32, #tpu.memory_space<vmem>>) attributes {dimension_semantics = [#tpu.dimension_semantics<parallel>], iteration_bounds = array<i64: 1>, scalar_prefetch = 0 : i64, scratch_operands = 0 : i64, tpu.core_type = #tpu.core_type<tc>, window_params = [{transform_indices = @transform_0, window_bounds = array<i64: 16, 1>}, {pipeline_mode = #tpu.pipeline_mode<synchronous>, transform_indices = @transform_1, window_bounds = array<i64: 64, 128>}, {transform_indices = @transform_2, window_bounds = array<i64: 16, 128>}]} {
    %c0 = arith.constant 0 : index
    %c0_0 = arith.constant 0 : index
    %0 = vector.load %arg1[%c0, %c0_0] : memref<16x1xi32, #tpu.memory_space<vmem>>, vector<16x1xi32>
    %c0_i32 = arith.constant 0 : i32
    %c63_i32 = arith.constant 63 : i32
    %1 = vector.broadcast %c0_i32 : i32 to vector<16x1xi32>
    %2 = arith.maxsi %1, %0 : vector<16x1xi32>
    %3 = vector.broadcast %c63_i32 : i32 to vector<16x1xi32>
    %4 = arith.minsi %3, %2 : vector<16x1xi32>
    %5 = tpu.iota {dimensions = array<i32: 1>} : vector<16x64xi32>
    %6 = vector.broadcast %4 : vector<16x1xi32> to vector<16x64xi32>
    %7 = arith.cmpi eq, %6, %5 : vector<16x64xi32>
    %8 = arith.extui %7 : vector<16x64xi1> to vector<16x64xi32>
    %9 = arith.sitofp %8 : vector<16x64xi32> to vector<16x64xf32>
    %c0_1 = arith.constant 0 : index
    %c0_2 = arith.constant 0 : index
    %10 = vector.load %arg2[%c0_1, %c0_2] : memref<64x128xf32, #tpu.memory_space<vmem>>, vector<64x128xf32>
    %cst = arith.constant dense<0.000000e+00> : vector<16x128xf32>
    %11 = tpu.matmul %9, %10, %cst {dimension_numbers = #tpu.dot_dimension_numbers<[1], [0], [0], [1], [0, 0, 1, 1], [], []>, precision = #tpu.contract_precision<fp32>} : vector<16x64xf32>, vector<64x128xf32>, vector<16x128xf32> -> vector<16x128xf32>
    %c0_3 = arith.constant 0 : index
    %c0_4 = arith.constant 0 : index
    %12 = vector.load %arg3[%c0_3, %c0_4] : memref<16x128xf32, #tpu.memory_space<vmem>>, vector<16x128xf32>
    tpu.vector_store %arg3[%c0_3, %c0_4], %11 {strides = array<i32>} : memref<16x128xf32, #tpu.memory_space<vmem>>, vector<16x128xf32>,
    return
  }
  func.func @transform_0(%arg0: i32) -> (i32, i32) {
    %c0_i32 = arith.constant 0 : i32
    %c0_i32_0 = arith.constant 0 : i32
    return %arg0, %c0_i32 : i32, i32
  }
  func.func @transform_1(%arg0: i32) -> (i32, i32) {
    %c0_i32 = arith.constant 0 : i32
    %c0_i32_0 = arith.constant 0 : i32
    %c0_i32_1 = arith.constant 0 : i32
    return %c0_i32, %c0_i32_0 : i32, i32
  }
  func.func @transform_2(%arg0: i32) -> (i32, i32) {
    %c0_i32 = arith.constant 0 : i32
    %c0_i32_0 = arith.constant 0 : i32
    return %arg0, %c0_i32 : i32, i32
  }
}

</mosaic_0001>

<llo_original>
// kernel: tpu_custom_call.1
$region0: #{tpu_custom_call.1}
  #allocation0 [shape = 'u32[]', space=smem, size = 0x4, offset = 0x4, fixed_abs, tag = 'smem constant byte address 0x4 - core index']
  #allocation1 [shape = 'u32[144,128]{1,0:T(1,128)}', space=vmem, size = 0x12000, scoped, tag = 'internal scratch']
  %s0 = inlined_call_operand.vmem [shape: s32[16,1], index: 0, kind: input, shape index: {}]
  %s1 = inlined_call_operand.hbm [shape: f32[64,128], index: 1, kind: input, shape index: {}]
  %s2 = inlined_call_operand.hbm [shape: f32[16,128], index: 2, kind: output, shape index: {}]
  %s3 = sld [smem:[#allocation0]]
  $region22: #{tpu_custom_call.1} parent=0
    _
  %s5 = ssub.s32 1, %s3
  %s6 = scalar_select 0, %s5, %s3
  $region1: #{tpu_custom_call.1} parent=0
    #allocation2 [shape = 'u8[32768]{0}', space=vmem, size = 0x8000, scoped, tag = 'input window, operand 1, single buffered']
    #allocation3 [shape = 's32[1]{0}', space=sflag, size = 0x4, scoped, tag = 'scoped memory for tpu_custom_call.1']
    #allocation4 [shape = 's32[1]{0}', space=sflag, size = 0x4, scoped, tag = 'scoped memory for tpu_custom_call.1']
    #allocation5 [shape = 'u8[8192]{0}', space=vmem, size = 0x2000, scoped, tag = 'output window, operand 0, single buffered']
    %7 = vsyncpa [#allocation3], 0
    %8 = vsyncpa [#allocation4], 0
    // Predicated region
    $region2: #{tpu_custom_call.1} parent=1 // pred_check
      _
    $region3: #{tpu_custom_call.1} parent=1 // pred_check_branch
      %10 = sbr.rel (0) target = $region5
    $region4: #{tpu_custom_call.1} parent=1 // pred_region
      _
    $region5: #{tpu_custom_call.1} parent=1 // pred_fallthru
      _
    // Predicated region
    $region6: #{tpu_custom_call.1} parent=1 // pred_check
      _
    $region7: #{tpu_custom_call.1} parent=1 // pred_check_branch
      %12 = sbr.rel (0) target = $region9
    $region8: #{tpu_custom_call.1} parent=1 // pred_region
      %s14 = ssub.s32 1024, 1024
      %15 = vsyncadd [#allocation3], %s14
      %s16 = sshll.u32 [#allocation2], 4
      %s17 = int_to_ptr.vmem [resolvable:$true] %s16
      %22 = dma.hbm_to_vmem [thread:$0]  %s1, 1024, %s17, [#allocation3], 128, 128, 8
    $region9: #{tpu_custom_call.1} parent=1 // pred_fallthru
      _
    // Predicated region
    $region10: #{tpu_custom_call.1} parent=1 // pred_check
      _
    $region11: #{tpu_custom_call.1} parent=1 // pred_check_branch
      %24 = sbr.rel (0) target = $region13
    $region12: #{tpu_custom_call.1} parent=1 // pred_region
      %25 = dma.done [#allocation3], 1024
    $region13: #{tpu_custom_call.1} parent=1 // pred_fallthru
      _
    %v26 = vld [vmem:[%s0] sm:$0xff]
    %v27 = vld [vmem:[%s0 + $0x8] sm:$0xff]
    %vm28 = vcmp.gt.s32.totalorder %v26, 0
    %v29 = vsel %vm28, %v26, 0
    %vm30 = vcmp.gt.s32.totalorder %v27, 0
    %v31 = vsel %vm30, %v27, 0
    %vm32 = vcmp.lt.s32.totalorder %v29, 63
    %v33 = vsel %vm32, %v29, 63
    %vm34 = vcmp.lt.s32.totalorder %v31, 63
    %v35 = vsel %vm34, %v31, 63
    %v36 = vlaneseq
    %v37 = vand.u32 %v36, 127
    %38 = vset.pattern.permute.xlu0 0
    %39 = vperm.xlu0 %38, %v33
    %v40 = vpop.permute.xlu0 %39
    %41 = vset.pattern.permute.xlu0 0
    %42 = vperm.xlu0 %41, %v35
    %v43 = vpop.permute.xlu0 %42
    %vm44 = vcmp.eq.s32.totalorder %v40, %v37
    %vm45 = vcmp.eq.s32.totalorder %v43, %v37
    %v46 = vsel %vm44, 1, 0
    %v47 = vsel %vm45, 1, 0
    %v48 = vcvt.s32.f32 %v46
    %v49 = vcvt.s32.f32 %v47
    %v50 = vld [vmem:[#allocation2] sm:$0xff]
    %v51 = vld [vmem:[#allocation2 + $0x8] sm:$0xff]
    %v52 = vld [vmem:[#allocation2 + $0x10] sm:$0xff]
    %v53 = vld [vmem:[#allocation2 + $0x18] sm:$0xff]
    %v54 = vld [vmem:[#allocation2 + $0x20] sm:$0xff]
    %v55 = vld [vmem:[#allocation2 + $0x28] sm:$0xff]
    %v56 = vld [vmem:[#allocation2 + $0x30] sm:$0xff]
    %v57 = vld [vmem:[#allocation2 + $0x38] sm:$0xff]
    %vm58 = vcmask 523264
    %v60 = vsel %vm58, %v48, 0
    %v63 = vsel %vm58, %v49, 0
    %65 = vmatprep.subr.mxu0 0.0
    %66 = vmatpush1.msra.mxu0 0.0
    %67 = vmatprep.subr.mxu0 0.0
    %68 = vmatpush1.msra.mxu0 0.0
    %69 = vmatprep.subr.mxu0 0.0
    %70 = vmatpush1.msra.mxu0 0.0
    %71 = vmatprep.subr.mxu0 0.0
    %72 = vmatpush1.msra.mxu0 0.0
    %73 = vmatprep.subr.mxu0 0.0
    %74 = vmatpush1.msra.mxu0 0.0
    %75 = vmatprep.subr.mxu0 0.0
    %76 = vmatpush1.msra.mxu0 0.0
    %77 = vmatprep.subr.mxu0 0.0
    %78 = vmatpush1.msra.mxu0 0.0
    %79 = vmatprep.subr.mxu0 0.0
    %80 = vmatpush1.msra.mxu0 0.0
    %81 = vmatprep.subr.mxu0 0.0
    %v82 = vand.u32 %v57, 4294901760
    %83 = vmatpush1.msra.mxu0 %v82
    %84 = vmatprep.subr.mxu0 0.0
    %v85 = vand.u32 %v56, 4294901760
    %86 = vmatpush1.msra.mxu0 %v85
    %87 = vmatprep.subr.mxu0 0.0
    %v88 = vand.u32 %v55, 4294901760
    %89 = vmatpush1.msra.mxu0 %v88
    %90 = vmatprep.subr.mxu0 0.0
    %v91 = vand.u32 %v54, 4294901760
    %92 = vmatpush1.msra.mxu0 %v91
    %93 = vmatprep.subr.mxu0 0.0
    %v94 = vand.u32 %v53, 4294901760
    %95 = vmatpush1.msra.mxu0 %v94
    %96 = vmatprep.subr.mxu0 0.0
    %v97 = vand.u32 %v52, 4294901760
    %98 = vmatpush1.msra.mxu0 %v97
    %99 = vmatprep.subr.mxu0 0.0
    %v100 = vand.u32 %v51, 4294901760
    %101 = vmatpush1.msra.mxu0 %v100
    %102 = vmatprep.subr.mxu0 0.0
    %v103 = vand.u32 %v50, 4294901760
    %104 = vmatpush1.msra.mxu0 %v103
    %105 = vmatprep.subr.mxu0 0.0
    %106 = vmatpush2.msra.mxu0 0.0
    %107 = vmatprep.subr.mxu0 0.0
    %108 = vmatpush2.msra.mxu0 0.0
    %109 = vmatprep.subr.mxu0 0.0
    %110 = vmatpush2.msra.mxu0 0.0
    %111 = vmatprep.subr.mxu0 0.0
    %112 = vmatpush2.msra.mxu0 0.0
    %113 = vmatprep.subr.mxu0 0.0
    %114 = vmatpush2.msra.mxu0 0.0
    %115 = vmatprep.subr.mxu0 0.0
    %116 = vmatpush2.msra.mxu0 0.0
    %117 = vmatprep.subr.mxu0 0.0
    %118 = vmatpush2.msra.mxu0 0.0
    %119 = vmatprep.subr.mxu0 0.0
    %120 = vmatpush2.msra.mxu0 0.0
    %121 = vmatprep.subr.mxu0 0.0
    %122 = vmatpush2.msra.mxu0 0.0
    %123 = vmatprep.subr.mxu0 0.0
    %124 = vmatpush2.msra.mxu0 0.0
    %125 = vmatprep.subr.mxu0 0.0
    %126 = vmatpush2.msra.mxu0 0.0
    %127 = vmatprep.subr.mxu0 0.0
    %128 = vmatpush2.msra.mxu0 0.0
    %129 = vmatprep.subr.mxu0 0.0
    %130 = vmatpush2.msra.mxu0 0.0
    %131 = vmatprep.subr.mxu0 0.0
    %132 = vmatpush2.msra.mxu0 0.0
    %133 = vmatprep.subr.mxu0 0.0
    %134 = vmatpush2.msra.mxu0 0.0
    %135 = vmatprep.subr.mxu0 0.0
    %136 = vmatpush2.msra.mxu0 0.0
    %137 = vmatprep.mubr.f32.mxu0 0.0
    %v138 = vand.u32 %v60, 4294901760
    %v139 = vsub.f32 %v60, %v138
    %v140 = vand.u32 %v139, 4294901760
    %v141 = vsub.f32 %v139, %v140
    %v142 = vand.u32 %v141, 4294901760
    %143 = vmatmul.mubr.f32.gmra.mxu0 %v142
    %v144 = vpop.f32.mrf.mxu0
    %v145 = vadd.f32 0.0, %v144
    %v146 = vpop.f32.mrf.mxu0
    %147 = vmatprep.mubr.f32.mxu0 0.0
    %v148 = vand.u32 %v63, 4294901760
    %v149 = vsub.f32 %v63, %v148
    %v150 = vand.u32 %v149, 4294901760
    %v151 = vsub.f32 %v149, %v150
    %v152 = vand.u32 %v151, 4294901760
    %153 = vmatmul.mubr.f32.gmra.mxu0 %v152
    %v154 = vpop.f32.mrf.mxu0
    %v155 = vadd.f32 0.0, %v154
    %v156 = vpop.f32.mrf.mxu0
    %157 = vdwg.mxu0
    %158 = vmatprep.subr.mxu0 0.0
    %159 = vmatpush1.msra.mxu0 0.0
    %160 = vmatprep.subr.mxu0 0.0
    %161 = vmatpush1.msra.mxu0 0.0
    %162 = vmatprep.subr.mxu0 0.0
    %163 = vmatpush1.msra.mxu0 0.0
    %164 = vmatprep.subr.mxu0 0.0
    %165 = vmatpush1.msra.mxu0 0.0
    %166 = vmatprep.subr.mxu0 0.0
    %167 = vmatpush1.msra.mxu0 0.0
    %168 = vmatprep.subr.mxu0 0.0
    %169 = vmatpush1.msra.mxu0 0.0
    %170 = vmatprep.subr.mxu0 0.0
    %171 = vmatpush1.msra.mxu0 0.0
    %172 = vmatprep.subr.mxu0 0.0
    %173 = vmatpush1.msra.mxu0 0.0
    %174 = vmatprep.subr.mxu0 0.0
    %v175 = vand.u32 %v57, 4294901760
    %v176 = vsub.f32 %v57, %v175
    %v177 = vand.u32 %v176, 4294901760
    %v178 = vsub.f32 %v176, %v177
    %v179 = vand.u32 %v178, 4294901760
    %180 = vmatpush1.msra.mxu0 %v179
    %181 = vmatprep.subr.mxu0 0.0
    %v182 = vand.u32 %v56, 4294901760
    %v183 = vsub.f32 %v56, %v182
    %v184 = vand.u32 %v183, 4294901760
    %v185 = vsub.f32 %v183, %v184
    %v186 = vand.u32 %v185, 4294901760
    %187 = vmatpush1.msra.mxu0 %v186
    %188 = vmatprep.subr.mxu0 0.0
    %v189 = vand.u32 %v55, 4294901760
    %v190 = vsub.f32 %v55, %v189
    %v191 = vand.u32 %v190, 4294901760
    %v192 = vsub.f32 %v190, %v191
    %v193 = vand.u32 %v192, 4294901760
    %194 = vmatpush1.msra.mxu0 %v193
    %195 = vmatprep.subr.mxu0 0.0
    %v196 = vand.u32 %v54, 4294901760
    %v197 = vsub.f32 %v54, %v196
    %v198 = vand.u32 %v197, 4294901760
    %v199 = vsub.f32 %v197, %v198
    %v200 = vand.u32 %v199, 4294901760
    %201 = vmatpush1.msra.mxu0 %v200
    %202 = vmatprep.subr.mxu0 0.0
    %v203 = vand.u32 %v53, 4294901760
    %v204 = vsub.f32 %v53, %v203
    %v205 = vand.u32 %v204, 4294901760
    %v206 = vsub.f32 %v204, %v205
    %v207 = vand.u32 %v206, 4294901760
    %208 = vmatpush1.msra.mxu0 %v207
    %209 = vmatprep.subr.mxu0 0.0
    %v210 = vand.u32 %v52, 4294901760
    %v211 = vsub.f32 %v52, %v210
    %v212 = vand.u32 %v211, 4294901760
    %v213 = vsub.f32 %v211, %v212
    %v214 = vand.u32 %v213, 4294901760
    %215 = vmatpush1.msra.mxu0 %v214
    %216 = vmatprep.subr.mxu0 0.0
    %v217 = vand.u32 %v51, 4294901760
    %v218 = vsub.f32 %v51, %v217
    %v219 = vand.u32 %v218, 4294901760
    %v220 = vsub.f32 %v218, %v219
    %v221 = vand.u32 %v220, 4294901760
    %222 = vmatpush1.msra.mxu0 %v221
    %223 = vmatprep.subr.mxu0 0.0
    %v224 = vand.u32 %v50, 4294901760
    %v225 = vsub.f32 %v50, %v224
    %v226 = vand.u32 %v225, 4294901760
    %v227 = vsub.f32 %v225, %v226
    %v228 = vand.u32 %v227, 4294901760
    %229 = vmatpush1.msra.mxu0 %v228
    %230 = vmatprep.subr.mxu0 0.0
    %231 = vmatpush2.msra.mxu0 0.0
    %232 = vmatprep.subr.mxu0 0.0
    %233 = vmatpush2.msra.mxu0 0.0
    %234 = vmatprep.subr.mxu0 0.0
    %235 = vmatpush2.msra.mxu0 0.0
    %236 = vmatprep.subr.mxu0 0.0
    %237 = vmatpush2.msra.mxu0 0.0
    %238 = vmatprep.subr.mxu0 0.0
    %239 = vmatpush2.msra.mxu0 0.0
    %240 = vmatprep.subr.mxu0 0.0
    %241 = vmatpush2.msra.mxu0 0.0
    %242 = vmatprep.subr.mxu0 0.0
    %243 = vmatpush2.msra.mxu0 0.0
    %244 = vmatprep.subr.mxu0 0.0
    %245 = vmatpush2.msra.mxu0 0.0
    %246 = vmatprep.subr.mxu0 0.0
    %247 = vmatpush2.msra.mxu0 0.0
    %248 = vmatprep.subr.mxu0 0.0
    %249 = vmatpush2.msra.mxu0 0.0
    %250 = vmatprep.subr.mxu0 0.0
    %251 = vmatpush2.msra.mxu0 0.0
    %252 = vmatprep.subr.mxu0 0.0
    %253 = vmatpush2.msra.mxu0 0.0
    %254 = vmatprep.subr.mxu0 0.0
    %255 = vmatpush2.msra.mxu0 0.0
    %256 = vmatprep.subr.mxu0 0.0
    %257 = vmatpush2.msra.mxu0 0.0
    %258 = vmatprep.subr.mxu0 0.0
    %259 = vmatpush2.msra.mxu0 0.0
    %260 = vmatprep.subr.mxu0 0.0
    %261 = vmatpush2.msra.mxu0 0.0
    %262 = vmatprep.mubr.f32.mxu0 0.0
    %v263 = vand.u32 %v60, 4294901760
    %264 = vmatmul.mubr.f32.gmra.mxu0 %v263
    %v265 = vpop.f32.mrf.mxu0
    %v266 = vadd.f32 %v145, %v265
    %v267 = vpop.f32.mrf.mxu0
    %268 = vmatprep.mubr.f32.mxu0 0.0
    %v269 = vand.u32 %v63, 4294901760
    %270 = vmatmul.mubr.f32.gmra.mxu0 %v269
    %v271 = vpop.f32.mrf.mxu0
    %v272 = vadd.f32 %v155, %v271
    %v273 = vpop.f32.mrf.mxu0
    %274 = vdwg.mxu0
    %275 = vmatprep.subr.mxu0 0.0
    %276 = vmatpush1.msra.mxu0 0.0
    %277 = vmatprep.subr.mxu0 0.0
    %278 = vmatpush1.msra.mxu0 0.0
    %279 = vmatprep.subr.mxu0 0.0
    %280 = vmatpush1.msra.mxu0 0.0
    %281 = vmatprep.subr.mxu0 0.0
    %282 = vmatpush1.msra.mxu0 0.0
    %283 = vmatprep.subr.mxu0 0.0
    %284 = vmatpush1.msra.mxu0 0.0
    %285 = vmatprep.subr.mxu0 0.0
    %286 = vmatpush1.msra.mxu0 0.0
    %287 = vmatprep.subr.mxu0 0.0
    %288 = vmatpush1.msra.mxu0 0.0
    %289 = vmatprep.subr.mxu0 0.0
    %290 = vmatpush1.msra.mxu0 0.0
    %291 = vmatprep.subr.mxu0 0.0
    %v292 = vand.u32 %v57, 4294901760
    %v293 = vsub.f32 %v57, %v292
    %294 = vmatpush1.msra.mxu0 %v293
    %295 = vmatprep.subr.mxu0 0.0
    %v296 = vand.u32 %v56, 4294901760
    %v297 = vsub.f32 %v56, %v296
    %298 = vmatpush1.msra.mxu0 %v297
    %299 = vmatprep.subr.mxu0 0.0
    %v300 = vand.u32 %v55, 4294901760
    %v301 = vsub.f32 %v55, %v300
    %302 = vmatpush1.msra.mxu0 %v301
    %303 = vmatprep.subr.mxu0 0.0
    %v304 = vand.u32 %v54, 4294901760
    %v305 = vsub.f32 %v54, %v304
    %306 = vmatpush1.msra.mxu0 %v305
    %307 = vmatprep.subr.mxu0 0.0
    %v308 = vand.u32 %v53, 4294901760
    %v309 = vsub.f32 %v53, %v308
    %310 = vmatpush1.msra.mxu0 %v309
    %311 = vmatprep.subr.mxu0 0.0
    %v312 = vand.u32 %v52, 4294901760
    %v313 = vsub.f32 %v52, %v312
    %314 = vmatpush1.msra.mxu0 %v313
    %315 = vmatprep.subr.mxu0 0.0
    %v316 = vand.u32 %v51, 4294901760
    %v317 = vsub.f32 %v51, %v316
    %318 = vmatpush1.msra.mxu0 %v317
    %319 = vmatprep.subr.mxu0 0.0
    %v320 = vand.u32 %v50, 4294901760
    %v321 = vsub.f32 %v50, %v320
    %322 = vmatpush1.msra.mxu0 %v321
    %323 = vmatprep.subr.mxu0 0.0
    %324 = vmatpush2.msra.mxu0 0.0
    %325 = vmatprep.subr.mxu0 0.0
    %326 = vmatpush2.msra.mxu0 0.0
    %327 = vmatprep.subr.mxu0 0.0
    %328 = vmatpush2.msra.mxu0 0.0
    %329 = vmatprep.subr.mxu0 0.0
    %330 = vmatpush2.msra.mxu0 0.0
    %331 = vmatprep.subr.mxu0 0.0
    %332 = vmatpush2.msra.mxu0 0.0
    %333 = vmatprep.subr.mxu0 0.0
    %334 = vmatpush2.msra.mxu0 0.0
    %335 = vmatprep.subr.mxu0 0.0
    %336 = vmatpush2.msra.mxu0 0.0
    %337 = vmatprep.subr.mxu0 0.0
    %338 = vmatpush2.msra.mxu0 0.0
    %339 = vmatprep.subr.mxu0 0.0
    %340 = vmatpush2.msra.mxu0 0.0
    %341 = vmatprep.subr.mxu0 0.0
    %342 = vmatpush2.msra.mxu0 0.0
    %343 = vmatprep.subr.mxu0 0.0
    %344 = vmatpush2.msra.mxu0 0.0
    %345 = vmatprep.subr.mxu0 0.0
    %346 = vmatpush2.msra.mxu0 0.0
    %347 = vmatprep.subr.mxu0 0.0
    %348 = vmatpush2.msra.mxu0 0.0
    %349 = vmatprep.subr.mxu0 0.0
    %350 = vmatpush2.msra.mxu0 0.0
    %351 = vmatprep.subr.mxu0 0.0
    %352 = vmatpush2.msra.mxu0 0.0
    %353 = vmatprep.subr.mxu0 0.0
    %354 = vmatpush2.msra.mxu0 0.0
    %355 = vmatprep.mubr.f32.mxu0 0.0
    %v356 = vand.u32 %v60, 4294901760
    %v357 = vsub.f32 %v60, %v356
    %358 = vmatmul.mubr.f32.gmra.mxu0 %v357
    %v359 = vpop.f32.mrf.mxu0
    %v360 = vadd.f32 %v266, %v359
    %v361 = vpop.f32.mrf.mxu0
    %362 = vmatprep.mubr.f32.mxu0 0.0
    %v363 = vand.u32 %v63, 4294901760
    %v364 = vsub.f32 %v63, %v363
    %365 = vmatmul.mubr.f32.gmra.mxu0 %v364
    %v366 = vpop.f32.mrf.mxu0
    %v367 = vadd.f32 %v272, %v366
    %v368 = vpop.f32.mrf.mxu0
    %369 = vdwg.mxu0
    %370 = vmatprep.subr.mxu0 0.0
    %371 = vmatpush1.msra.mxu0 0.0
    %372 = vmatprep.subr.mxu0 0.0
    %373 = vmatpush1.msra.mxu0 0.0
    %374 = vmatprep.subr.mxu0 0.0
    %375 = vmatpush1.msra.mxu0 0.0
    %376 = vmatprep.subr.mxu0 0.0
    %377 = vmatpush1.msra.mxu0 0.0
    %378 = vmatprep.subr.mxu0 0.0
    %379 = vmatpush1.msra.mxu0 0.0
    %380 = vmatprep.subr.mxu0 0.0
    %381 = vmatpush1.msra.mxu0 0.0
    %382 = vmatprep.subr.mxu0 0.0
    %383 = vmatpush1.msra.mxu0 0.0
    %384 = vmatprep.subr.mxu0 0.0
    %385 = vmatpush1.msra.mxu0 0.0
    %386 = vmatprep.subr.mxu0 0.0
    %v387 = vand.u32 %v57, 4294901760
    %388 = vmatpush1.msra.mxu0 %v387
    %389 = vmatprep.subr.mxu0 0.0
    %v390 = vand.u32 %v56, 4294901760
    %391 = vmatpush1.msra.mxu0 %v390
    %392 = vmatprep.subr.mxu0 0.0
    %v393 = vand.u32 %v55, 4294901760
    %394 = vmatpush1.msra.mxu0 %v393
    %395 = vmatprep.subr.mxu0 0.0
    %v396 = vand.u32 %v54, 4294901760
    %397 = vmatpush1.msra.mxu0 %v396
    %398 = vmatprep.subr.mxu0 0.0
    %v399 = vand.u32 %v53, 4294901760
    %400 = vmatpush1.msra.mxu0 %v399
    %401 = vmatprep.subr.mxu0 0.0
    %v402 = vand.u32 %v52, 4294901760
    %403 = vmatpush1.msra.mxu0 %v402
    %404 = vmatprep.subr.mxu0 0.0
    %v405 = vand.u32 %v51, 4294901760
    %406 = vmatpush1.msra.mxu0 %v405
    %407 = vmatprep.subr.mxu0 0.0
    %v408 = vand.u32 %v50, 4294901760
    %409 = vmatpush1.msra.mxu0 %v408
    %410 = vmatprep.subr.mxu0 0.0
    %411 = vmatpush2.msra.mxu0 0.0
    %412 = vmatprep.subr.mxu0 0.0
    %413 = vmatpush2.msra.mxu0 0.0
    %414 = vmatprep.subr.mxu0 0.0
    %415 = vmatpush2.msra.mxu0 0.0
    %416 = vmatprep.subr.mxu0 0.0
    %417 = vmatpush2.msra.mxu0 0.0
    %418 = vmatprep.subr.mxu0 0.0
    %419 = vmatpush2.msra.mxu0 0.0
    %420 = vmatprep.subr.mxu0 0.0
    %421 = vmatpush2.msra.mxu0 0.0
    %422 = vmatprep.subr.mxu0 0.0
    %423 = vmatpush2.msra.mxu0 0.0
    %424 = vmatprep.subr.mxu0 0.0
    %425 = vmatpush2.msra.mxu0 0.0
    %426 = vmatprep.subr.mxu0 0.0
    %427 = vmatpush2.msra.mxu0 0.0
    %428 = vmatprep.subr.mxu0 0.0
    %429 = vmatpush2.msra.mxu0 0.0
    %430 = vmatprep.subr.mxu0 0.0
    %431 = vmatpush2.msra.mxu0 0.0
    %432 = vmatprep.subr.mxu0 0.0
    %433 = vmatpush2.msra.mxu0 0.0
    %434 = vmatprep.subr.mxu0 0.0
    %435 = vmatpush2.msra.mxu0 0.0
    %436 = vmatprep.subr.mxu0 0.0
    %437 = vmatpush2.msra.mxu0 0.0
    %438 = vmatprep.subr.mxu0 0.0
    %439 = vmatpush2.msra.mxu0 0.0
    %440 = vmatprep.subr.mxu0 0.0
    %441 = vmatpush2.msra.mxu0 0.0
    %442 = vmatprep.mubr.f32.mxu0 0.0
    %v443 = vand.u32 %v60, 4294901760
    %v444 = vsub.f32 %v60, %v443
    %v445 = vand.u32 %v444, 4294901760
    %446 = vmatmul.mubr.f32.gmra.mxu0 %v445
    %v447 = vpop.f32.mrf.mxu0
    %v448 = vadd.f32 %v360, %v447
    %v449 = vpop.f32.mrf.mxu0
    %450 = vmatprep.mubr.f32.mxu0 0.0
    %v451 = vand.u32 %v63, 4294901760
    %v452 = vsub.f32 %v63, %v451
    %v453 = vand.u32 %v452, 4294901760
    %454 = vmatmul.mubr.f32.gmra.mxu0 %v453
    %v455 = vpop.f32.mrf.mxu0
    %v456 = vadd.f32 %v367, %v455
    %v457 = vpop.f32.mrf.mxu0
    %458 = vdwg.mxu0
    %459 = vmatprep.subr.mxu0 0.0
    %460 = vmatpush1.msra.mxu0 0.0
    %461 = vmatprep.subr.mxu0 0.0
    %462 = vmatpush1.msra.mxu0 0.0
    %463 = vmatprep.subr.mxu0 0.0
    %464 = vmatpush1.msra.mxu0 0.0
    %465 = vmatprep.subr.mxu0 0.0
    %466 = vmatpush1.msra.mxu0 0.0
    %467 = vmatprep.subr.mxu0 0.0
    %468 = vmatpush1.msra.mxu0 0.0
    %469 = vmatprep.subr.mxu0 0.0
    %470 = vmatpush1.msra.mxu0 0.0
    %471 = vmatprep.subr.mxu0 0.0
    %472 = vmatpush1.msra.mxu0 0.0
    %473 = vmatprep.subr.mxu0 0.0
    %474 = vmatpush1.msra.mxu0 0.0
    %475 = vmatprep.subr.mxu0 0.0
    %v476 = vand.u32 %v57, 4294901760
    %v477 = vsub.f32 %v57, %v476
    %v478 = vand.u32 %v477, 4294901760
    %479 = vmatpush1.msra.mxu0 %v478
    %480 = vmatprep.subr.mxu0 0.0
    %v481 = vand.u32 %v56, 4294901760
    %v482 = vsub.f32 %v56, %v481
    %v483 = vand.u32 %v482, 4294901760
    %484 = vmatpush1.msra.mxu0 %v483
    %485 = vmatprep.subr.mxu0 0.0
    %v486 = vand.u32 %v55, 4294901760
    %v487 = vsub.f32 %v55, %v486
    %v488 = vand.u32 %v487, 4294901760
    %489 = vmatpush1.msra.mxu0 %v488
    %490 = vmatprep.subr.mxu0 0.0
    %v491 = vand.u32 %v54, 4294901760
    %v492 = vsub.f32 %v54, %v491
    %v493 = vand.u32 %v492, 4294901760
    %494 = vmatpush1.msra.mxu0 %v493
    %495 = vmatprep.subr.mxu0 0.0
    %v496 = vand.u32 %v53, 4294901760
    %v497 = vsub.f32 %v53, %v496
    %v498 = vand.u32 %v497, 4294901760
    %499 = vmatpush1.msra.mxu0 %v498
    %500 = vmatprep.subr.mxu0 0.0
    %v501 = vand.u32 %v52, 4294901760
    %v502 = vsub.f32 %v52, %v501
    %v503 = vand.u32 %v502, 4294901760
    %504 = vmatpush1.msra.mxu0 %v503
    %505 = vmatprep.subr.mxu0 0.0
    %v506 = vand.u32 %v51, 4294901760
    %v507 = vsub.f32 %v51, %v506
    %v508 = vand.u32 %v507, 4294901760
    %509 = vmatpush1.msra.mxu0 %v508
    %510 = vmatprep.subr.mxu0 0.0
    %v511 = vand.u32 %v50, 4294901760
    %v512 = vsub.f32 %v50, %v511
    %v513 = vand.u32 %v512, 4294901760
    %514 = vmatpush1.msra.mxu0 %v513
    %515 = vmatprep.subr.mxu0 0.0
    %516 = vmatpush2.msra.mxu0 0.0
    %517 = vmatprep.subr.mxu0 0.0
    %518 = vmatpush2.msra.mxu0 0.0
    %519 = vmatprep.subr.mxu0 0.0
    %520 = vmatpush2.msra.mxu0 0.0
    %521 = vmatprep.subr.mxu0 0.0
    %522 = vmatpush2.msra.mxu0 0.0
    %523 = vmatprep.subr.mxu0 0.0
    %524 = vmatpush2.msra.mxu0 0.0
    %525 = vmatprep.subr.mxu0 0.0
    %526 = vmatpush2.msra.mxu0 0.0
    %527 = vmatprep.subr.mxu0 0.0
    %528 = vmatpush2.msra.mxu0 0.0
    %529 = vmatprep.subr.mxu0 0.0
    %530 = vmatpush2.msra.mxu0 0.0
    %531 = vmatprep.subr.mxu0 0.0
    %532 = vmatpush2.msra.mxu0 0.0
    %533 = vmatprep.subr.mxu0 0.0
    %534 = vmatpush2.msra.mxu0 0.0
    %535 = vmatprep.subr.mxu0 0.0
    %536 = vmatpush2.msra.mxu0 0.0
    %537 = vmatprep.subr.mxu0 0.0
    %538 = vmatpush2.msra.mxu0 0.0
    %539 = vmatprep.subr.mxu0 0.0
    %540 = vmatpush2.msra.mxu0 0.0
    %541 = vmatprep.subr.mxu0 0.0
    %542 = vmatpush2.msra.mxu0 0.0
    %543 = vmatprep.subr.mxu0 0.0
    %544 = vmatpush2.msra.mxu0 0.0
    %545 = vmatprep.subr.mxu0 0.0
    %546 = vmatpush2.msra.mxu0 0.0
    %547 = vmatprep.mubr.f32.mxu0 0.0
    %v548 = vand.u32 %v60, 4294901760
    %549 = vmatmul.mubr.f32.gmra.mxu0 %v548
    %v550 = vpop.f32.mrf.mxu0
    %v551 = vadd.f32 %v448, %v550
    %v552 = vpop.f32.mrf.mxu0
    %553 = vmatprep.mubr.f32.mxu0 0.0
    %v554 = vand.u32 %v63, 4294901760
    %555 = vmatmul.mubr.f32.gmra.mxu0 %v554
    %v556 = vpop.f32.mrf.mxu0
    %v557 = vadd.f32 %v456, %v556
    %v558 = vpop.f32.mrf.mxu0
    %559 = vdwg.mxu0
    %560 = vmatprep.subr.mxu0 0.0
    %561 = vmatpush1.msra.mxu0 0.0
    %562 = vmatprep.subr.mxu0 0.0
    %563 = vmatpush1.msra.mxu0 0.0
    %564 = vmatprep.subr.mxu0 0.0
    %565 = vmatpush1.msra.mxu0 0.0
    %566 = vmatprep.subr.mxu0 0.0
    %567 = vmatpush1.msra.mxu0 0.0
    %568 = vmatprep.subr.mxu0 0.0
    %569 = vmatpush1.msra.mxu0 0.0
    %570 = vmatprep.subr.mxu0 0.0
    %571 = vmatpush1.msra.mxu0 0.0
    %572 = vmatprep.subr.mxu0 0.0
    %573 = vmatpush1.msra.mxu0 0.0
    %574 = vmatprep.subr.mxu0 0.0
    %575 = vmatpush1.msra.mxu0 0.0
    %576 = vmatprep.subr.mxu0 0.0
    %v577 = vand.u32 %v57, 4294901760
    %578 = vmatpush1.msra.mxu0 %v577
    %579 = vmatprep.subr.mxu0 0.0
    %v580 = vand.u32 %v56, 4294901760
    %581 = vmatpush1.msra.mxu0 %v580
    %582 = vmatprep.subr.mxu0 0.0
    %v583 = vand.u32 %v55, 4294901760
    %584 = vmatpush1.msra.mxu0 %v583
    %585 = vmatprep.subr.mxu0 0.0
    %v586 = vand.u32 %v54, 4294901760
    %587 = vmatpush1.msra.mxu0 %v586
    %588 = vmatprep.subr.mxu0 0.0
    %v589 = vand.u32 %v53, 4294901760
    %590 = vmatpush1.msra.mxu0 %v589
    %591 = vmatprep.subr.mxu0 0.0
    %v592 = vand.u32 %v52, 4294901760
    %593 = vmatpush1.msra.mxu0 %v592
    %594 = vmatprep.subr.mxu0 0.0
    %v595 = vand.u32 %v51, 4294901760
    %596 = vmatpush1.msra.mxu0 %v595
    %597 = vmatprep.subr.mxu0 0.0
    %v598 = vand.u32 %v50, 4294901760
    %599 = vmatpush1.msra.mxu0 %v598
    %600 = vmatprep.subr.mxu0 0.0
    %601 = vmatpush2.msra.mxu0 0.0
    %602 = vmatprep.subr.mxu0 0.0
    %603 = vmatpush2.msra.mxu0 0.0
    %604 = vmatprep.subr.mxu0 0.0
    %605 = vmatpush2.msra.mxu0 0.0
    %606 = vmatprep.subr.mxu0 0.0
    %607 = vmatpush2.msra.mxu0 0.0
    %608 = vmatprep.subr.mxu0 0.0
    %609 = vmatpush2.msra.mxu0 0.0
    %610 = vmatprep.subr.mxu0 0.0
    %611 = vmatpush2.msra.mxu0 0.0
    %612 = vmatprep.subr.mxu0 0.0
    %613 = vmatpush2.msra.mxu0 0.0
    %614 = vmatprep.subr.mxu0 0.0
    %615 = vmatpush2.msra.mxu0 0.0
    %616 = vmatprep.subr.mxu0 0.0
    %617 = vmatpush2.msra.mxu0 0.0
    %618 = vmatprep.subr.mxu0 0.0
    %619 = vmatpush2.msra.mxu0 0.0
    %620 = vmatprep.subr.mxu0 0.0
    %621 = vmatpush2.msra.mxu0 0.0
    %622 = vmatprep.subr.mxu0 0.0
    %623 = vmatpush2.msra.mxu0 0.0
    %624 = vmatprep.subr.mxu0 0.0
    %625 = vmatpush2.msra.mxu0 0.0
    %626 = vmatprep.subr.mxu0 0.0
    %627 = vmatpush2.msra.mxu0 0.0
    %628 = vmatprep.subr.mxu0 0.0
    %629 = vmatpush2.msra.mxu0 0.0
    %630 = vmatprep.subr.mxu0 0.0
    %631 = vmatpush2.msra.mxu0 0.0
    %632 = vmatprep.mubr.f32.mxu0 0.0
    %v633 = vand.u32 %v60, 4294901760
    %634 = vmatmul.mubr.f32.gmra.mxu0 %v633
    %v635 = vpop.f32.mrf.mxu0
    %v636 = vadd.f32 %v551, %v635
    %v637 = vpop.f32.mrf.mxu0
    %638 = vmatprep.mubr.f32.mxu0 0.0
    %v639 = vand.u32 %v63, 4294901760
    %640 = vmatmul.mubr.f32.gmra.mxu0 %v639
    %v641 = vpop.f32.mrf.mxu0
    %v642 = vadd.f32 %v557, %v641
    %v643 = vpop.f32.mrf.mxu0
    %644 = vdwg.mxu0
    %645 = vst [vmem:[#allocation5] sm:$0xff] %v636
    %646 = vst [vmem:[#allocation5 + $0x8] sm:$0xff] %v642
    // Predicated region
    $region14: #{tpu_custom_call.1} parent=1 // pred_check
      _
    $region15: #{tpu_custom_call.1} parent=1 // pred_check_branch
      %648 = sbr.rel (0) target = $region17
    $region16: #{tpu_custom_call.1} parent=1 // pred_region
      %s650 = ssub.s32 256, 256
      %651 = vsyncadd [#allocation4], %s650
      %s652 = sshll.u32 [#allocation5], 4
      %s653 = int_to_ptr.vmem [resolvable:$true] %s652
      %658 = dma.vmem_to_hbm [thread:$0]  %s653, 256, %s2, [#allocation4], 128, 128, 8
    $region17: #{tpu_custom_call.1} parent=1 // pred_fallthru
      _
    // Predicated region
    $region18: #{tpu_custom_call.1} parent=1 // pred_check
      _
    $region19: #{tpu_custom_call.1} parent=1 // pred_check_branch
      %660 = sbr.rel (0) target = $region21
    $region20: #{tpu_custom_call.1} parent=1 // pred_region
      %661 = dma.done [#allocation4], 256
    $region21: #{tpu_custom_call.1} parent=1 // pred_fallthru
      _
    %662 = vsyncpa [#allocation3], 1
    %663 = vsyncpa [#allocation4], 1

</llo_original>
